<compile_context>
chip_gen: v7x
topology: tpu7x:2x2x1
jax: 0.10.0
libtpu: 0.0.40
codegen_flags: <defaults>
</compile_context>

<pallas_src>
import math

import jax
import jax.numpy as jnp
import numpy as np
from jax.experimental import pallas as pl
from jax.experimental.pallas import tpu as pltpu


def _round_up(x, m):
    return ((x + m - 1) // m) * m


# ----------------------------------- kernel -----------------------------------
def _predictor_kernel(o_ref, d_ref, dis_ref, w_ref, b_ref, out_ref):
    ti, d = o_ref.shape               # TI origin rows of this tile, emb dim D
    n = d_ref.shape[0]                # all N destination rows (resident)
    f = out_ref.shape[-1]             # F = GAT_outdim - 1 (full extent, no padding)

    w = w_ref[...]                    # (2*D + H, F), VMEM resident
    # o / d / dis contributions; the dis term is one flat 2-D MXU dot per tile.
    a = jnp.dot(o_ref[...], w[:d, :], preferred_element_type=jnp.float32)          # (TI, F)
    bm = jnp.dot(d_ref[...], w[d:2 * d, :], preferred_element_type=jnp.float32)    # (N, F)
    c = jnp.dot(dis_ref[...], w[2 * d:, :], preferred_element_type=jnp.float32)    # (TI*N, F)

    # per-tile broadcast only: (TI, N, F), flattened i-major to match dis row order.
    ab = (a[:, None, :] + bm[None, :, :]).reshape(ti * n, f)
    y = c + ab + b_ref[...]
    out_ref[...] = (y * jax.nn.sigmoid(y)).astype(out_ref.dtype)                   # SiLU


# --------------------------------- tiling helpers ---------------------------------
def _choose_block_rows(n, target_rows=2048):
    """Largest TI (multiple of 8, dividing N) with TI*N <= target; else whole problem."""
    if n * n <= target_rows:
        return n
    cands = [ti for ti in range(8, n, 8) if n % ti == 0 and ti * n <= target_rows]
    return max(cands) if cands else n


def _vmem_limit_bytes(block_shapes, itemsize=4):
    """Conservative per-step VMEM need (lane pad 128 / sublane pad 8, double-buffered)."""
    def padded(shape):
        lead = int(np.prod(shape[:-2])) if len(shape) > 2 else 1
        s = _round_up(int(shape[-2]), 8)
        l = _round_up(int(shape[-1]), 128)
        return lead * s * l * itemsize

    need = 2 * sum(padded(s) for s in block_shapes)          # x2: double buffering
    return int(min(max(2 * need + (2 << 20), 16 << 20), 40 << 20))


# ----------------------------------- wrapper -----------------------------------
def predictor(o_emb, d_emb, dis, fc_w, fc_b, *, block_rows=None):
    """Predictor.forward.

    o_emb: (N, D), d_emb: (N, D), dis: (N, N, H),
    fc_w: (2*D + H, F) math-layout weight, fc_b: (F,)  ->  flow (N, N, F).
    """
    n, d = o_emb.shape
    h = dis.shape[-1]
    f = fc_w.shape[1]
    assert fc_w.shape[0] == 2 * d + h

    ti = block_rows if block_rows is not None else _choose_block_rows(n)
    assert n % ti == 0 and (ti % 8 == 0 or ti == n), \
        "block_rows must divide N and be a multiple of 8 (or equal N)"
    grid = (n // ti,)

    dis_flat = dis.reshape(n * n, h)          # contiguous reshape: free in XLA
    b2 = fc_b.reshape(1, f)

    flops = 2 * (2 * n * d * f + n * n * h * f) + 4 * n * n * f
    bytes_accessed = int((o_emb.size + d_emb.size + dis_flat.size
                          + fc_w.size + b2.size + n * n * f) * 4)
    vmem_limit = _vmem_limit_bytes(
        [(ti, d), (n, d), (ti * n, h), tuple(fc_w.shape), (1, f), (ti * n, f)])

    out_flat = pl.pallas_call(
        _predictor_kernel,
        grid=grid,
        in_specs=[
            pl.BlockSpec((ti, d), lambda i: (i, 0)),       # o_emb rows of this tile
            pl.BlockSpec((n, d), lambda i: (0, 0)),        # d_emb: VMEM resident
            pl.BlockSpec((ti * n, h), lambda i: (i, 0)),   # dis (i-major flat rows)
            pl.BlockSpec(tuple(fc_w.shape), lambda i: (0, 0)),  # fc weight: resident
            pl.BlockSpec((1, f), lambda i: (0, 0)),        # fc bias: resident
        ],
        out_specs=pl.BlockSpec((ti * n, f), lambda i: (i, 0)),   # compact, full-extent F
        out_shape=jax.ShapeDtypeStruct((n * n, f), jnp.float32),
        compiler_params=pltpu.CompilerParams(
            dimension_semantics=("parallel",),             # shards grid across v7x's 2 TCs
            vmem_limit_bytes=vmem_limit),
        cost_estimate=pl.CostEstimate(flops=int(flops),
                                      transcendentals=int(n * n * f),
                                      bytes_accessed=bytes_accessed),
    )(o_emb, d_emb, dis_flat, fc_w, b2)
    return out_flat.reshape(n, n, f)


# ------------------------------ pure-JAX reference ------------------------------
def predictor_reference(o_emb, d_emb, dis, fc_w, fc_b):
    n, d = o_emb.shape
    o_exp = jnp.broadcast_to(o_emb[:, None, :], (n, n, d))
    d_exp = jnp.broadcast_to(d_emb[None, :, :], (n, n, d))
    hid = jnp.concatenate([o_exp, d_exp, dis], axis=-1)
    y = jnp.matmul(hid, fc_w, precision=jax.lax.Precision.HIGHEST) + fc_b
    return jax.nn.silu(y)


# ------------------------------------- main -------------------------------------
if __name__ == "__main__":
    D = 16          # GAT_outdim
    H = 32          # disProj_hiddim
    F = D - 1       # fc output features

    key = jax.random.PRNGKey(0)
    k_w, k_b, k_o1, k_d1, k_s1, k_o2, k_d2, k_s2 = jax.random.split(key, 8)
    bound = 1.0 / math.sqrt(2 * D + H)
    fc_w = jax.random.uniform(k_w, (2 * D + H, F), jnp.float32, -bound, bound)
    fc_b = jax.random.uniform(k_b, (F,), jnp.float32, -bound, bound)

    # --- case 1: N = 8, single grid step (small-shape / overhead-bound regime) ---
    N1 = 8
    o1 = jax.random.normal(k_o1, (N1, D), jnp.float32)
    d1 = jax.random.normal(k_d1, (N1, D), jnp.float32)
    dis1 = jax.random.normal(k_s1, (N1, N1, H), jnp.float32)
    out1 = predictor(o1, d1, dis1, fc_w, fc_b)
    jax.block_until_ready(out1)
    ref1 = predictor_reference(o1, d1, dis1, fc_w, fc_b)
    assert out1.shape == (N1, N1, F)
    np.testing.assert_allclose(np.asarray(out1), np.asarray(ref1), rtol=1e-4, atol=1e-5)

    # --- case 2: N = 16 with TI = 8 -> 2 grid steps (exercises the row tiling) ---
    N2 = 16
    o2 = jax.random.normal(k_o2, (N2, D), jnp.float32)
    d2 = jax.random.normal(k_d2, (N2, D), jnp.float32)
    dis2 = jax.random.normal(k_s2, (N2, N2, H), jnp.float32)
    out2 = predictor(o2, d2, dis2, fc_w, fc_b, block_rows=8)
    jax.block_until_ready(out2)
    ref2 = predictor_reference(o2, d2, dis2, fc_w, fc_b)
    assert out2.shape == (N2, N2, F)
    np.testing.assert_allclose(np.asarray(out2), np.asarray(ref2), rtol=1e-4, atol=1e-5)

    print("KERNEL_OK")
</pallas_src>

<mosaic_0001>
module attributes {stable_mosaic.version = 11 : i64} {
  func.func @_predictor_kernel(%arg0: i32, %arg1: memref<8x16xf32, #tpu.memory_space<vmem>>, %arg2: memref<8x16xf32, #tpu.memory_space<vmem>>, %arg3: memref<64x32xf32, #tpu.memory_space<vmem>>, %arg4: memref<64x15xf32, #tpu.memory_space<vmem>>, %arg5: memref<1x15xf32, #tpu.memory_space<vmem>>, %arg6: memref<64x15xf32, #tpu.memory_space<vmem>>) attributes {dimension_semantics = [#tpu.dimension_semantics<parallel>], iteration_bounds = array<i64: 1>, scalar_prefetch = 0 : i64, scratch_operands = 0 : i64, tpu.core_type = #tpu.core_type<tc>, window_params = [{transform_indices = @transform_0, window_bounds = array<i64: 8, 16>}, {pipeline_mode = #tpu.pipeline_mode<synchronous>, transform_indices = @transform_1, window_bounds = array<i64: 8, 16>}, {transform_indices = @transform_2, window_bounds = array<i64: 64, 32>}, {pipeline_mode = #tpu.pipeline_mode<synchronous>, transform_indices = @transform_3, window_bounds = array<i64: 64, 15>}, {pipeline_mode = #tpu.pipeline_mode<synchronous>, transform_indices = @transform_4, window_bounds = array<i64: 1, 15>}, {transform_indices = @transform_5, window_bounds = array<i64: 64, 15>}]} {
    %c0 = arith.constant 0 : index
    %c0_0 = arith.constant 0 : index
    %0 = vector.load %arg4[%c0, %c0_0] : memref<64x15xf32, #tpu.memory_space<vmem>>, vector<64x15xf32>
    %c0_1 = arith.constant 0 : index
    %c0_2 = arith.constant 0 : index
    %1 = vector.load %arg1[%c0_1, %c0_2] : memref<8x16xf32, #tpu.memory_space<vmem>>, vector<8x16xf32>
    %2 = vector.extract_strided_slice %0 {offsets = [0, 0], sizes = [16, 15], strides = [1, 1]} : vector<64x15xf32> to vector<16x15xf32>
    %cst = arith.constant dense<0.000000e+00> : vector<8x15xf32>
    %3 = tpu.matmul %1, %2, %cst {dimension_numbers = #tpu.dot_dimension_numbers<[1], [0], [0], [1], [0, 0, 1, 1], [], []>} : vector<8x16xf32>, vector<16x15xf32>, vector<8x15xf32> -> vector<8x15xf32>
    %c0_3 = arith.constant 0 : index
    %c0_4 = arith.constant 0 : index
    %4 = vector.load %arg2[%c0_3, %c0_4] : memref<8x16xf32, #tpu.memory_space<vmem>>, vector<8x16xf32>
    %5 = vector.extract_strided_slice %0 {offsets = [16, 0], sizes = [16, 15], strides = [1, 1]} : vector<64x15xf32> to vector<16x15xf32>
    %cst_5 = arith.constant dense<0.000000e+00> : vector<8x15xf32>
    %6 = tpu.matmul %4, %5, %cst_5 {dimension_numbers = #tpu.dot_dimension_numbers<[1], [0], [0], [1], [0, 0, 1, 1], [], []>} : vector<8x16xf32>, vector<16x15xf32>, vector<8x15xf32> -> vector<8x15xf32>
    %c0_6 = arith.constant 0 : index
    %c0_7 = arith.constant 0 : index
    %7 = vector.load %arg3[%c0_6, %c0_7] : memref<64x32xf32, #tpu.memory_space<vmem>>, vector<64x32xf32>
    %8 = vector.extract_strided_slice %0 {offsets = [32, 0], sizes = [32, 15], strides = [1, 1]} : vector<64x15xf32> to vector<32x15xf32>
    %cst_8 = arith.constant dense<0.000000e+00> : vector<64x15xf32>
    %9 = tpu.matmul %7, %8, %cst_8 {dimension_numbers = #tpu.dot_dimension_numbers<[1], [0], [0], [1], [0, 0, 1, 1], [], []>} : vector<64x32xf32>, vector<32x15xf32>, vector<64x15xf32> -> vector<64x15xf32>
    %10 = vector.shape_cast %3 : vector<8x15xf32> to vector<8x1x15xf32>
    %11 = vector.shape_cast %6 : vector<8x15xf32> to vector<1x8x15xf32>
    %12 = vector.broadcast %10 : vector<8x1x15xf32> to vector<8x8x15xf32>
    %13 = vector.broadcast %11 : vector<1x8x15xf32> to vector<8x8x15xf32>
    %14 = arith.addf %12, %13 : vector<8x8x15xf32>
    %15 = vector.shape_cast %14 : vector<8x8x15xf32> to vector<64x15xf32>
    %16 = arith.addf %9, %15 : vector<64x15xf32>
    %c0_9 = arith.constant 0 : index
    %c0_10 = arith.constant 0 : index
    %17 = vector.load %arg5[%c0_9, %c0_10] : memref<1x15xf32, #tpu.memory_space<vmem>>, vector<1x15xf32>
    %18 = vector.broadcast %17 : vector<1x15xf32> to vector<64x15xf32>
    %19 = arith.addf %16, %18 : vector<64x15xf32>
    %20 = arith.negf %19 : vector<64x15xf32>
    %21 = math.exp %20 : vector<64x15xf32>
    %cst_11 = arith.constant 1.000000e+00 : f32
    %22 = vector.broadcast %cst_11 : f32 to vector<64x15xf32>
    %23 = arith.addf %22, %21 : vector<64x15xf32>
    %24 = arith.divf %22, %23 : vector<64x15xf32>
    %25 = arith.mulf %19, %24 : vector<64x15xf32>
    %c0_12 = arith.constant 0 : index
    %c0_13 = arith.constant 0 : index
    %26 = vector.load %arg6[%c0_12, %c0_13] : memref<64x15xf32, #tpu.memory_space<vmem>>, vector<64x15xf32>
    tpu.vector_store %arg6[%c0_12, %c0_13], %25 {strides = array<i32>} : memref<64x15xf32, #tpu.memory_space<vmem>>, vector<64x15xf32>,
    return
  }
  func.func @transform_0(%arg0: i32) -> (i32, i32) {
    %c0_i32 = arith.constant 0 : i32
    %c0_i32_0 = arith.constant 0 : i32
    return %arg0, %c0_i32 : i32, i32
  }
  func.func @transform_1(%arg0: i32) -> (i32, i32) {
    %c0_i32 = arith.constant 0 : i32
    %c0_i32_0 = arith.constant 0 : i32
    %c0_i32_1 = arith.constant 0 : i32
    return %c0_i32, %c0_i32_0 : i32, i32
  }
  func.func @transform_2(%arg0: i32) -> (i32, i32) {
    %c0_i32 = arith.constant 0 : i32
    %c0_i32_0 = arith.constant 0 : i32
    return %arg0, %c0_i32 : i32, i32
  }
  func.func @transform_3(%arg0: i32) -> (i32, i32) {
    %c0_i32 = arith.constant 0 : i32
    %c0_i32_0 = arith.constant 0 : i32
    %c0_i32_1 = arith.constant 0 : i32
    return %c0_i32, %c0_i32_0 : i32, i32
  }
  func.func @transform_4(%arg0: i32) -> (i32, i32) {
    %c0_i32 = arith.constant 0 : i32
    %c0_i32_0 = arith.constant 0 : i32
    %c0_i32_1 = arith.constant 0 : i32
    return %c0_i32, %c0_i32_0 : i32, i32
  }
  func.func @transform_5(%arg0: i32) -> (i32, i32) {
    %c0_i32 = arith.constant 0 : i32
    %c0_i32_0 = arith.constant 0 : i32
    return %arg0, %c0_i32 : i32, i32
  }
}

</mosaic_0001>

<llo_original>
// kernel: tpu_custom_call.1
$region0: #{tpu_custom_call.1}
  #allocation0 [shape = 'u32[]', space=smem, size = 0x4, offset = 0x4, fixed_abs, tag = 'smem constant byte address 0x4 - core index']
  #allocation1 [shape = 'u32[144,128]{1,0:T(1,128)}', space=vmem, size = 0x12000, scoped, tag = 'internal scratch']
  %s0 = inlined_call_operand.vmem [shape: f32[8,16], index: 0, kind: input, shape index: {}]
  %s1 = inlined_call_operand.vmem [shape: f32[8,16], index: 1, kind: input, shape index: {}]
  %s2 = inlined_call_operand.vmem [shape: f32[64,32], index: 2, kind: input, shape index: {}]
  %s3 = inlined_call_operand.vmem [shape: f32[64,15], index: 3, kind: input, shape index: {}]
  %s4 = inlined_call_operand.vmem [shape: f32[1,15], index: 4, kind: input, shape index: {}]
  %s5 = inlined_call_operand.vmem [shape: f32[64,15], index: 5, kind: output, shape index: {}]
  %s6 = sld [smem:[#allocation0]]
  $region30: #{tpu_custom_call.1} parent=0
    _
  %s8 = ssub.s32 1, %s6
  %s9 = scalar_select 0, %s8, %s6
  // Predicated region
  $region2: #{tpu_custom_call.1} parent=0 // pred_check
    _
  $region3: #{tpu_custom_call.1} parent=0 // pred_check_branch
    %11 = sbr.rel (0) target = $region5
  $region4: #{tpu_custom_call.1} parent=0 // pred_region
    _
  $region5: #{tpu_custom_call.1} parent=0 // pred_fallthru
    _
  // Predicated region
  $region6: #{tpu_custom_call.1} parent=0 // pred_check
    _
  $region7: #{tpu_custom_call.1} parent=0 // pred_check_branch
    %13 = sbr.rel (0) target = $region9
  $region8: #{tpu_custom_call.1} parent=0 // pred_region
    _
  $region9: #{tpu_custom_call.1} parent=0 // pred_fallthru
    _
  // Predicated region
  $region10: #{tpu_custom_call.1} parent=0 // pred_check
    _
  $region11: #{tpu_custom_call.1} parent=0 // pred_check_branch
    %15 = sbr.rel (0) target = $region13
  $region12: #{tpu_custom_call.1} parent=0 // pred_region
    _
  $region13: #{tpu_custom_call.1} parent=0 // pred_fallthru
    _
  // Predicated region
  $region14: #{tpu_custom_call.1} parent=0 // pred_check
    _
  $region15: #{tpu_custom_call.1} parent=0 // pred_check_branch
    %17 = sbr.rel (0) target = $region17
  $region16: #{tpu_custom_call.1} parent=0 // pred_region
    _
  $region17: #{tpu_custom_call.1} parent=0 // pred_fallthru
    _
  // Predicated region
  $region18: #{tpu_custom_call.1} parent=0 // pred_check
    _
  $region19: #{tpu_custom_call.1} parent=0 // pred_check_branch
    %19 = sbr.rel (0) target = $region21
  $region20: #{tpu_custom_call.1} parent=0 // pred_region
    _
  $region21: #{tpu_custom_call.1} parent=0 // pred_fallthru
    _
  %v20 = vld [vmem:[%s3] sm:$0xff]
  %v21 = vld [vmem:[%s3 + $0x8] sm:$0xff]
  %v22 = vld [vmem:[%s3 + $0x10] sm:$0xff]
  %v23 = vld [vmem:[%s3 + $0x18] sm:$0xff]
  %v24 = vld [vmem:[%s3 + $0x20] sm:$0xff]
  %v25 = vld [vmem:[%s3 + $0x28] sm:$0xff]
  %v26 = vld [vmem:[%s3 + $0x30] sm:$0xff]
  %v27 = vld [vmem:[%s3 + $0x38] sm:$0xff]
  %v28 = vld [vmem:[%s0] sm:$0xff]
  %vm29 = vcmask 130048
  %v31 = vsel %vm29, %v28, 0
  %33 = vmatprep.subr.mxu0 0.0
  %34 = vmatpush1.msra.mxu0 %v20
  %35 = vmatprep.subr.mxu0 0.0
  %36 = vmatpush1.msra.mxu0 %v21
  %37 = vmatprep.subr.mxu0 0.0
  %38 = vmatpush1.msra.mxu0 0.0
  %39 = vmatprep.subr.mxu0 0.0
  %40 = vmatpush1.msra.mxu0 0.0
  %41 = vmatprep.subr.mxu0 0.0
  %42 = vmatpush1.msra.mxu0 0.0
  %43 = vmatprep.subr.mxu0 0.0
  %44 = vmatpush1.msra.mxu0 0.0
  %45 = vmatprep.subr.mxu0 0.0
  %46 = vmatpush1.msra.mxu0 0.0
  %47 = vmatprep.subr.mxu0 0.0
  %48 = vmatpush1.msra.mxu0 0.0
  %49 = vmatprep.subr.mxu0 0.0
  %50 = vmatpush1.msra.mxu0 0.0
  %51 = vmatprep.subr.mxu0 0.0
  %52 = vmatpush1.msra.mxu0 0.0
  %53 = vmatprep.subr.mxu0 0.0
  %54 = vmatpush1.msra.mxu0 0.0
  %55 = vmatprep.subr.mxu0 0.0
  %56 = vmatpush1.msra.mxu0 0.0
  %57 = vmatprep.subr.mxu0 0.0
  %58 = vmatpush1.msra.mxu0 0.0
  %59 = vmatprep.subr.mxu0 0.0
  %60 = vmatpush1.msra.mxu0 0.0
  %61 = vmatprep.subr.mxu0 0.0
  %62 = vmatpush1.msra.mxu0 0.0
  %63 = vmatprep.subr.mxu0 0.0
  %64 = vmatpush1.msra.mxu0 0.0
  %65 = vmatprep.subr.mxu0 0.0
  %66 = vmatpush1.msra.mxu0 0.0
  %67 = vmatprep.subr.mxu0 0.0
  %68 = vmatpush1.msra.mxu0 0.0
  %69 = vmatprep.subr.mxu0 0.0
  %70 = vmatpush1.msra.mxu0 0.0
  %71 = vmatprep.subr.mxu0 0.0
  %72 = vmatpush1.msra.mxu0 0.0
  %73 = vmatprep.subr.mxu0 0.0
  %74 = vmatpush1.msra.mxu0 0.0
  %75 = vmatprep.subr.mxu0 0.0
  %76 = vmatpush1.msra.mxu0 0.0
  %77 = vmatprep.subr.mxu0 0.0
  %78 = vmatpush1.msra.mxu0 0.0
  %79 = vmatprep.subr.mxu0 0.0
  %80 = vmatpush1.msra.mxu0 0.0
  %81 = vmatprep.subr.mxu0 0.0
  %82 = vmatpush1.msra.mxu0 0.0
  %83 = vmatprep.subr.mxu0 0.0
  %84 = vmatpush1.msra.mxu0 0.0
  %85 = vmatprep.subr.mxu0 0.0
  %86 = vmatpush1.msra.mxu0 0.0
  %87 = vmatprep.subr.mxu0 0.0
  %88 = vmatpush1.msra.mxu0 0.0
  %89 = vmatprep.subr.mxu0 0.0
  %90 = vmatpush1.msra.mxu0 0.0
  %91 = vmatprep.subr.mxu0 0.0
  %92 = vmatpush1.msra.mxu0 0.0
  %93 = vmatprep.subr.mxu0 0.0
  %94 = vmatpush1.msra.mxu0 0.0
  %95 = vmatprep.subr.mxu0 0.0
  %96 = vmatpush1.msra.mxu0 0.0
  %97 = vmatprep.mubr.f32.mxu0 0.0
  %98 = vmatmul.mubr.f32.gmra.mrb[0].mxu0 %v31
  %v99 = vpop.f32.mrb[0].mxu0
  %v100 = vadd.f32 0.0, %v99
  %v101 = vpop.f32.mrb[0].mxu0
  %102 = vdwg.mxu0
  %v103 = vld [vmem:[%s1] sm:$0xff]
  %v105 = vsel %vm29, %v103, 0
  %107 = vmatprep.subr.mxu0 0.0
  %108 = vmatpush1.msra.mxu0 %v22
  %109 = vmatprep.subr.mxu0 0.0
  %110 = vmatpush1.msra.mxu0 %v23
  %111 = vmatprep.subr.mxu0 0.0
  %112 = vmatpush1.msra.mxu0 0.0
  %113 = vmatprep.subr.mxu0 0.0
  %114 = vmatpush1.msra.mxu0 0.0
  %115 = vmatprep.subr.mxu0 0.0
  %116 = vmatpush1.msra.mxu0 0.0
  %117 = vmatprep.subr.mxu0 0.0
  %118 = vmatpush1.msra.mxu0 0.0
  %119 = vmatprep.subr.mxu0 0.0
  %120 = vmatpush1.msra.mxu0 0.0
  %121 = vmatprep.subr.mxu0 0.0
  %122 = vmatpush1.msra.mxu0 0.0
  %123 = vmatprep.subr.mxu0 0.0
  %124 = vmatpush1.msra.mxu0 0.0
  %125 = vmatprep.subr.mxu0 0.0
  %126 = vmatpush1.msra.mxu0 0.0
  %127 = vmatprep.subr.mxu0 0.0
  %128 = vmatpush1.msra.mxu0 0.0
  %129 = vmatprep.subr.mxu0 0.0
  %130 = vmatpush1.msra.mxu0 0.0
  %131 = vmatprep.subr.mxu0 0.0
  %132 = vmatpush1.msra.mxu0 0.0
  %133 = vmatprep.subr.mxu0 0.0
  %134 = vmatpush1.msra.mxu0 0.0
  %135 = vmatprep.subr.mxu0 0.0
  %136 = vmatpush1.msra.mxu0 0.0
  %137 = vmatprep.subr.mxu0 0.0
  %138 = vmatpush1.msra.mxu0 0.0
  %139 = vmatprep.subr.mxu0 0.0
  %140 = vmatpush1.msra.mxu0 0.0
  %141 = vmatprep.subr.mxu0 0.0
  %142 = vmatpush1.msra.mxu0 0.0
  %143 = vmatprep.subr.mxu0 0.0
  %144 = vmatpush1.msra.mxu0 0.0
  %145 = vmatprep.subr.mxu0 0.0
  %146 = vmatpush1.msra.mxu0 0.0
  %147 = vmatprep.subr.mxu0 0.0
  %148 = vmatpush1.msra.mxu0 0.0
  %149 = vmatprep.subr.mxu0 0.0
  %150 = vmatpush1.msra.mxu0 0.0
  %151 = vmatprep.subr.mxu0 0.0
  %152 = vmatpush1.msra.mxu0 0.0
  %153 = vmatprep.subr.mxu0 0.0
  %154 = vmatpush1.msra.mxu0 0.0
  %155 = vmatprep.subr.mxu0 0.0
  %156 = vmatpush1.msra.mxu0 0.0
  %157 = vmatprep.subr.mxu0 0.0
  %158 = vmatpush1.msra.mxu0 0.0
  %159 = vmatprep.subr.mxu0 0.0
  %160 = vmatpush1.msra.mxu0 0.0
  %161 = vmatprep.subr.mxu0 0.0
  %162 = vmatpush1.msra.mxu0 0.0
  %163 = vmatprep.subr.mxu0 0.0
  %164 = vmatpush1.msra.mxu0 0.0
  %165 = vmatprep.subr.mxu0 0.0
  %166 = vmatpush1.msra.mxu0 0.0
  %167 = vmatprep.subr.mxu0 0.0
  %168 = vmatpush1.msra.mxu0 0.0
  %169 = vmatprep.subr.mxu0 0.0
  %170 = vmatpush1.msra.mxu0 0.0
  %171 = vmatprep.mubr.f32.mxu0 0.0
  %172 = vmatmul.mubr.f32.gmra.mrb[0].mxu0 %v105
  %v173 = vpop.f32.mrb[0].mxu0
  %v174 = vadd.f32 0.0, %v173
  %v175 = vpop.f32.mrb[0].mxu0
  %176 = vdwg.mxu0
  %v177 = vld [vmem:[%s2] sm:$0xff]
  %v178 = vld [vmem:[%s2 + $0x8] sm:$0xff]
  %v179 = vld [vmem:[%s2 + $0x10] sm:$0xff]
  %v180 = vld [vmem:[%s2 + $0x18] sm:$0xff]
  %v181 = vld [vmem:[%s2 + $0x20] sm:$0xff]
  %v182 = vld [vmem:[%s2 + $0x28] sm:$0xff]
  %v183 = vld [vmem:[%s2 + $0x30] sm:$0xff]
  %v184 = vld [vmem:[%s2 + $0x38] sm:$0xff]
  %v186 = vcombine.high %v100, %v100
  %v188 = vunpack.c.l.s4 1966171168
  %v189 = vunpack.c.0.s8 %v188
  %v190 = vlaneseq
  %v191 = vshrl.u32 %v190, 7
  %v192 = vsub.s32 %v189, %v191
  %v193 = vrot.slane %v100, %v192
  %v195 = vunpack.c.l.s4 1966171168
  %v196 = vunpack.c.0.s8 %v195
  %v197 = vlaneseq
  %v198 = vshrl.u32 %v197, 7
  %v199 = vsub.s32 %v196, %v198
  %v200 = vrot.slane %v186, %v199
  %v201 = vcombine.high %v193, %v193
  %v202 = vcombine.high %v200, %v200
  %v204 = vunpack.c.l.s4 1966171168
  %v205 = vunpack.c.0.s8 %v204
  %v206 = vlaneseq
  %v207 = vshrl.u32 %v206, 7
  %v208 = vsub.s32 %v205, %v207
  %v209 = vrot.slane %v193, %v208
  %v211 = vunpack.c.l.s4 1966171168
  %v212 = vunpack.c.0.s8 %v211
  %v213 = vlaneseq
  %v214 = vshrl.u32 %v213, 7
  %v215 = vsub.s32 %v212, %v214
  %v216 = vrot.slane %v200, %v215
  %v218 = vunpack.c.l.s4 1966171168
  %v219 = vunpack.c.0.s8 %v218
  %v220 = vlaneseq
  %v221 = vshrl.u32 %v220, 7
  %v222 = vsub.s32 %v219, %v221
  %v223 = vrot.slane %v201, %v222
  %v225 = vunpack.c.l.s4 1966171168
  %v226 = vunpack.c.0.s8 %v225
  %v227 = vlaneseq
  %v228 = vshrl.u32 %v227, 7
  %v229 = vsub.s32 %v226, %v228
  %v230 = vrot.slane %v202, %v229
  %v231 = vcombine.high %v209, %v209
  %v232 = vcombine.high %v216, %v216
  %v233 = vcombine.high %v223, %v223
  %v234 = vcombine.high %v230, %v230
  %v235 = vlaneseq
  %v236 = vshrl.u32 %v235, 7
  %v237 = vsub.s32 0, %v236
  %v238 = vrot.slane %v209, %v237
  %v239 = vlaneseq
  %v240 = vshrl.u32 %v239, 7
  %v241 = vsub.s32 0, %v240
  %v242 = vrot.slane %v223, %v241
  %v243 = vlaneseq
  %v244 = vshrl.u32 %v243, 7
  %v245 = vsub.s32 0, %v244
  %v246 = vrot.slane %v231, %v245
  %v247 = vlaneseq
  %v248 = vshrl.u32 %v247, 7
  %v249 = vsub.s32 0, %v248
  %v250 = vrot.slane %v233, %v249
  %v251 = vlaneseq
  %v252 = vshrl.u32 %v251, 7
  %v253 = vsub.s32 0, %v252
  %v254 = vrot.slane %v216, %v253
  %v255 = vlaneseq
  %v256 = vshrl.u32 %v255, 7
  %v257 = vsub.s32 0, %v256
  %v258 = vrot.slane %v230, %v257
  %v259 = vlaneseq
  %v260 = vshrl.u32 %v259, 7
  %v261 = vsub.s32 0, %v260
  %v262 = vrot.slane %v232, %v261
  %v263 = vlaneseq
  %v264 = vshrl.u32 %v263, 7
  %v265 = vsub.s32 0, %v264
  %v266 = vrot.slane %v234, %v265
  %v275 = vadd.f32 %v238, %v174
  %v276 = vadd.f32 %v242, %v174
  %v277 = vadd.f32 %v246, %v174
  %v278 = vadd.f32 %v250, %v174
  %v279 = vadd.f32 %v254, %v174
  %v280 = vadd.f32 %v258, %v174
  %v281 = vadd.f32 %v262, %v174
  %v282 = vadd.f32 %v266, %v174
  %vm283 = vcmask 261120
  %v285 = vsel %vm283, %v177, 0
  %v288 = vsel %vm283, %v178, 0
  %v291 = vsel %vm283, %v179, 0
  %v294 = vsel %vm283, %v180, 0
  %v297 = vsel %vm283, %v181, 0
  %v300 = vsel %vm283, %v182, 0
  %v303 = vsel %vm283, %v183, 0
  %v306 = vsel %vm283, %v184, 0
  %308 = vmatprep.subr.mxu0 0.0
  %309 = vmatpush1.msra.mxu0 %v24
  %310 = vmatprep.subr.mxu0 0.0
  %311 = vmatpush1.msra.mxu0 %v25
  %312 = vmatprep.subr.mxu0 0.0
  %313 = vmatpush1.msra.mxu0 %v26
  %314 = vmatprep.subr.mxu0 0.0
  %315 = vmatpush1.msra.mxu0 %v27
  %316 = vmatprep.subr.mxu0 0.0
  %317 = vmatpush1.msra.mxu0 0.0
  %318 = vmatprep.subr.mxu0 0.0
  %319 = vmatpush1.msra.mxu0 0.0
  %320 = vmatprep.subr.mxu0 0.0
  %321 = vmatpush1.msra.mxu0 0.0
  %322 = vmatprep.subr.mxu0 0.0
  %323 = vmatpush1.msra.mxu0 0.0
  %324 = vmatprep.subr.mxu0 0.0
  %325 = vmatpush1.msra.mxu0 0.0
  %326 = vmatprep.subr.mxu0 0.0
  %327 = vmatpush1.msra.mxu0 0.0
  %328 = vmatprep.subr.mxu0 0.0
  %329 = vmatpush1.msra.mxu0 0.0
  %330 = vmatprep.subr.mxu0 0.0
  %331 = vmatpush1.msra.mxu0 0.0
  %332 = vmatprep.subr.mxu0 0.0
  %333 = vmatpush1.msra.mxu0 0.0
  %334 = vmatprep.subr.mxu0 0.0
  %335 = vmatpush1.msra.mxu0 0.0
  %336 = vmatprep.subr.mxu0 0.0
  %337 = vmatpush1.msra.mxu0 0.0
  %338 = vmatprep.subr.mxu0 0.0
  %339 = vmatpush1.msra.mxu0 0.0
  %340 = vmatprep.subr.mxu0 0.0
  %341 = vmatpush1.msra.mxu0 0.0
  %342 = vmatprep.subr.mxu0 0.0
  %343 = vmatpush1.msra.mxu0 0.0
  %344 = vmatprep.subr.mxu0 0.0
  %345 = vmatpush1.msra.mxu0 0.0
  %346 = vmatprep.subr.mxu0 0.0
  %347 = vmatpush1.msra.mxu0 0.0
  %348 = vmatprep.subr.mxu0 0.0
  %349 = vmatpush1.msra.mxu0 0.0
  %350 = vmatprep.subr.mxu0 0.0
  %351 = vmatpush1.msra.mxu0 0.0
  %352 = vmatprep.subr.mxu0 0.0
  %353 = vmatpush1.msra.mxu0 0.0
  %354 = vmatprep.subr.mxu0 0.0
  %355 = vmatpush1.msra.mxu0 0.0
  %356 = vmatprep.subr.mxu0 0.0
  %357 = vmatpush1.msra.mxu0 0.0
  %358 = vmatprep.subr.mxu0 0.0
  %359 = vmatpush1.msra.mxu0 0.0
  %360 = vmatprep.subr.mxu0 0.0
  %361 = vmatpush1.msra.mxu0 0.0
  %362 = vmatprep.subr.mxu0 0.0
  %363 = vmatpush1.msra.mxu0 0.0
  %364 = vmatprep.subr.mxu0 0.0
  %365 = vmatpush1.msra.mxu0 0.0
  %366 = vmatprep.subr.mxu0 0.0
  %367 = vmatpush1.msra.mxu0 0.0
  %368 = vmatprep.subr.mxu0 0.0
  %369 = vmatpush1.msra.mxu0 0.0
  %370 = vmatprep.subr.mxu0 0.0
  %371 = vmatpush1.msra.mxu0 0.0
  %372 = vmatprep.mubr.f32.mxu0 0.0
  %373 = vmatmul.mubr.f32.gmra.mrb[0].mxu0 %v285
  %v374 = vpop.f32.mrb[0].mxu0
  %v375 = vadd.f32 %v275, %v374
  %v376 = vpop.f32.mrb[0].mxu0
  %377 = vmatprep.mubr.f32.mxu0 0.0
  %378 = vmatmul.mubr.f32.gmra.mrb[0].mxu0 %v288
  %v379 = vpop.f32.mrb[0].mxu0
  %v380 = vadd.f32 %v276, %v379
  %v381 = vpop.f32.mrb[0].mxu0
  %382 = vmatprep.mubr.f32.mxu0 0.0
  %383 = vmatmul.mubr.f32.gmra.mrb[0].mxu0 %v291
  %v384 = vpop.f32.mrb[0].mxu0
  %v385 = vadd.f32 %v277, %v384
  %v386 = vpop.f32.mrb[0].mxu0
  %387 = vmatprep.mubr.f32.mxu0 0.0
  %388 = vmatmul.mubr.f32.gmra.mrb[0].mxu0 %v294
  %v389 = vpop.f32.mrb[0].mxu0
  %v390 = vadd.f32 %v278, %v389
  %v391 = vpop.f32.mrb[0].mxu0
  %392 = vmatprep.mubr.f32.mxu0 0.0
  %393 = vmatmul.mubr.f32.gmra.mrb[0].mxu0 %v297
  %v394 = vpop.f32.mrb[0].mxu0
  %v395 = vadd.f32 %v279, %v394
  %v396 = vpop.f32.mrb[0].mxu0
  %397 = vmatprep.mubr.f32.mxu0 0.0
  %398 = vmatmul.mubr.f32.gmra.mrb[0].mxu0 %v300
  %v399 = vpop.f32.mrb[0].mxu0
  %v400 = vadd.f32 %v280, %v399
  %v401 = vpop.f32.mrb[0].mxu0
  %402 = vmatprep.mubr.f32.mxu0 0.0
  %403 = vmatmul.mubr.f32.gmra.mrb[0].mxu0 %v303
  %v404 = vpop.f32.mrb[0].mxu0
  %v405 = vadd.f32 %v281, %v404
  %v406 = vpop.f32.mrb[0].mxu0
  %407 = vmatprep.mubr.f32.mxu0 0.0
  %408 = vmatmul.mubr.f32.gmra.mrb[0].mxu0 %v306
  %v409 = vpop.f32.mrb[0].mxu0
  %v410 = vadd.f32 %v282, %v409
  %v411 = vpop.f32.mrb[0].mxu0
  %412 = vdwg.mxu0
  %v413 = vld [vmem:[%s4] sm:$0x1]
  %v415 = vlaneseq
  %v416 = vshrl.u32 %v415, 7
  %v417 = vsub.s32 0, %v416
  %v418 = vrot.slane %v413, %v417
  %v420 = vadd.f32 %v375, %v418
  %v421 = vadd.f32 %v380, %v418
  %v422 = vadd.f32 %v385, %v418
  %v423 = vadd.f32 %v390, %v418
  %v424 = vadd.f32 %v395, %v418
  %v425 = vadd.f32 %v400, %v418
  %v426 = vadd.f32 %v405, %v418
  %v427 = vadd.f32 %v410, %v418
  %v428 = vxor.u32 %v420, 2147483648
  %v429 = vxor.u32 %v421, 2147483648
  %v430 = vxor.u32 %v422, 2147483648
  %v431 = vxor.u32 %v423, 2147483648
  %v432 = vxor.u32 %v424, 2147483648
  %v433 = vxor.u32 %v425, 2147483648
  %v434 = vxor.u32 %v426, 2147483648
  %v435 = vxor.u32 %v427, 2147483648
  %v436 = vmul.f32 %v428, 1.442695
  %v437 = vpow.pop %v436
  %v438 = vmul.f32 %v429, 1.442695
  %v439 = vpow.pop %v438
  %v440 = vmul.f32 %v430, 1.442695
  %v441 = vpow.pop %v440
  %v442 = vmul.f32 %v431, 1.442695
  %v443 = vpow.pop %v442
  %v444 = vmul.f32 %v432, 1.442695
  %v445 = vpow.pop %v444
  %v446 = vmul.f32 %v433, 1.442695
  %v447 = vpow.pop %v446
  %v448 = vmul.f32 %v434, 1.442695
  %v449 = vpow.pop %v448
  %v450 = vmul.f32 %v435, 1.442695
  %v451 = vpow.pop %v450
  %v452 = vadd.f32 %v437, 1.0
  %v453 = vadd.f32 %v439, 1.0
  %v454 = vadd.f32 %v441, 1.0
  %v455 = vadd.f32 %v443, 1.0
  %v456 = vadd.f32 %v445, 1.0
  %v457 = vadd.f32 %v447, 1.0
  %v458 = vadd.f32 %v449, 1.0
  %v459 = vadd.f32 %v451, 1.0
  %v460 = vrcp.pop %v452
  %v461 = vmul.f32 1.0, %v460
  %v462 = vrcp.pop %v453
  %v463 = vmul.f32 1.0, %v462
  %v464 = vrcp.pop %v454
  %v465 = vmul.f32 1.0, %v464
  %v466 = vrcp.pop %v455
  %v467 = vmul.f32 1.0, %v466
  %v468 = vrcp.pop %v456
  %v469 = vmul.f32 1.0, %v468
  %v470 = vrcp.pop %v457
  %v471 = vmul.f32 1.0, %v470
  %v472 = vrcp.pop %v458
  %v473 = vmul.f32 1.0, %v472
  %v474 = vrcp.pop %v459
  %v475 = vmul.f32 1.0, %v474
  %v476 = vmul.f32 %v420, %v461
  %v477 = vmul.f32 %v421, %v463
  %v478 = vmul.f32 %v422, %v465
  %v479 = vmul.f32 %v423, %v467
  %v480 = vmul.f32 %v424, %v469
  %v481 = vmul.f32 %v425, %v471
  %v482 = vmul.f32 %v426, %v473
  %v483 = vmul.f32 %v427, %v475
  %vm484 = vcmask 121856
  %485 = vst.msk [vmem:[%s5] sm:$0xff] %vm484, %v476
  %486 = vst.msk [vmem:[%s5 + $0x8] sm:$0xff] %vm484, %v477
  %487 = vst.msk [vmem:[%s5 + $0x10] sm:$0xff] %vm484, %v478
  %488 = vst.msk [vmem:[%s5 + $0x18] sm:$0xff] %vm484, %v479
  %489 = vst.msk [vmem:[%s5 + $0x20] sm:$0xff] %vm484, %v480
  %490 = vst.msk [vmem:[%s5 + $0x28] sm:$0xff] %vm484, %v481
  %491 = vst.msk [vmem:[%s5 + $0x30] sm:$0xff] %vm484, %v482
  %492 = vst.msk [vmem:[%s5 + $0x38] sm:$0xff] %vm484, %v483
  // Predicated region
  $region22: #{tpu_custom_call.1} parent=0 // pred_check
    _
  $region23: #{tpu_custom_call.1} parent=0 // pred_check_branch
    %494 = sbr.rel (0) target = $region25
  $region24: #{tpu_custom_call.1} parent=0 // pred_region
    _
  $region25: #{tpu_custom_call.1} parent=0 // pred_fallthru
    _
  // Predicated region
  $region26: #{tpu_custom_call.1} parent=0 // pred_check
    _
  $region27: #{tpu_custom_call.1} parent=0 // pred_check_branch
    %496 = sbr.rel (0) target = $region29
  $region28: #{tpu_custom_call.1} parent=0 // pred_region
    _
  $region29: #{tpu_custom_call.1} parent=0 // pred_fallthru
    _

</llo_original>
